<compile_context>
chip_gen: v7x
topology: tpu7x:2x2x1
jax: 0.10.0
libtpu: 0.0.40
codegen_flags: <defaults>
</compile_context>

<pallas_src>
import functools

import jax
import jax.numpy as jnp
from jax.experimental import pallas as pl
from jax.experimental.pallas import tpu as pltpu

LANE = 128  # TPU lane width; hidden dims are zero-padded to this inside the weight slab.


def _round_up(x, m):
    return (x + m - 1) // m * m


def _lrelu(v, negative_slope=0.01):
    # nn.LeakyReLU(negative_slope=0.01); inplace=True has no functional effect.
    return jnp.where(v >= 0, v, negative_slope * v)


def mlp_kernel(x_ref, w_ref, b_ref, o_ref):
    """Fused 4-layer MLP on one batch tile.

    x_ref: [block_b, F]     f32 input rows (F = true num_features, equals full array dim)
    w_ref: [L, 128, 128]    bf16 zero-padded packed weights ([in, out] layout), resident
    b_ref: [L, 1, 128]      f32 zero-padded packed biases, resident
    o_ref: [block_b, OUT]   f32 narrow output (OUT = true out_features)
    """
    n_layers = w_ref.shape[0]
    f_in = x_ref.shape[-1]
    out_features = o_ref.shape[-1]

    # Layer 0: cast the streamed f32 rows to bf16 in-kernel (VPU has huge slack) and
    # contract against the first f_in rows of the padded weight.  F=16 is exactly one
    # bf16 (16,128) sublane-packed tile, so the static slice is free.
    x_bf16 = x_ref[...].astype(jnp.bfloat16)
    h = jnp.dot(x_bf16, w_ref[0][:f_in, :], preferred_element_type=jnp.float32)
    h = _lrelu(h + b_ref[0])

    # Layers 1..L-1: uniform [block_b,128] @ [128,128]; zero padding keeps results exact.
    for l in range(1, n_layers):
        h = jnp.dot(h.astype(jnp.bfloat16), w_ref[l],
                    preferred_element_type=jnp.float32)
        h = _lrelu(h + b_ref[l])

    # Narrow store of the real output columns only (masked vst cost is noise vs. the
    # 16x HBM writeback saved by not emitting a 128-lane padded output).
    o_ref[...] = h[:, :out_features].astype(o_ref.dtype)


def pack_mlp_params(params, *, lane=LANE, weight_dtype=jnp.bfloat16):
    """Pack per-layer (w [in,out], b [1,out]) into zero-padded resident slabs. Call ONCE."""
    n = len(params)
    w_p = jnp.zeros((n, lane, lane), weight_dtype)
    b_p = jnp.zeros((n, 1, lane), jnp.float32)
    for l, (w, b) in enumerate(params):
        din, dout = w.shape
        w_p = w_p.at[l, :din, :dout].set(w.astype(weight_dtype))
        b_p = b_p.at[l, 0, :dout].set(b.reshape(-1).astype(jnp.float32))
    return w_p, b_p


@functools.partial(jax.jit, static_argnames=("out_features", "block_b"))
def mlp_forward(x, w_p, b_p, *, out_features, block_b=None):
    """Fused MLP forward. x: [B, num_features] f32 -> [B, out_features] f32."""
    B, F = x.shape

    if block_b is None:
        # Aim for >= 2 grid steps (both v7x TensorCores), cap at 4096 rows per step,
        # always a multiple of 8 sublanes.
        block_b = min(4096, max(8, _round_up(-(-B // 2), 8)))
    block_b = max(8, _round_up(block_b, 8))

    grid_b = pl.cdiv(B, block_b)

    return pl.pallas_call(
        mlp_kernel,
        out_shape=jax.ShapeDtypeStruct((B, out_features), jnp.float32),
        grid_spec=pltpu.PrefetchScalarGridSpec(
            num_scalar_prefetch=0,
            grid=(grid_b,),
            in_specs=[
                pl.BlockSpec((block_b, F), lambda i: (i, 0)),    # streamed batch tile
                pl.BlockSpec(w_p.shape, lambda i: (0, 0, 0)),    # resident packed weights
                pl.BlockSpec(b_p.shape, lambda i: (0, 0, 0)),    # resident packed biases
            ],
            out_specs=pl.BlockSpec((block_b, out_features), lambda i: (i, 0)),
        ),
        compiler_params=pltpu.CompilerParams(
            dimension_semantics=("parallel",)),                  # megacore-shardable on v7x
    )(x, w_p, b_p)


def init_mlp_params(key, num_features, hidden_dims, out_features):
    """Deterministic init matching the layer shapes of the PyTorch module."""
    dims = (num_features,) + tuple(hidden_dims) + (out_features,)
    params = []
    for i in range(len(dims) - 1):
        key, kw, kb = jax.random.split(key, 3)
        fan_in = dims[i]
        bound = 1.0 / float(jnp.sqrt(fan_in))
        # weight stored as [in, out] (transpose of PyTorch's [out, in])
        w = jax.random.uniform(kw, (dims[i], dims[i + 1]), jnp.float32,
                               minval=-bound, maxval=bound)
        b = jax.random.uniform(kb, (1, dims[i + 1]), jnp.float32,
                               minval=-bound, maxval=bound)
        params.append((w, b))
    return params


def mlp_reference(x, params):
    """Pure-JAX reference that emulates the kernel's bf16 storage / f32 accumulation."""
    h = x.astype(jnp.bfloat16).astype(jnp.float32)
    for (w, b) in params:
        wq = w.astype(jnp.bfloat16).astype(jnp.float32)
        h = jnp.dot(h, wq, precision=jax.lax.Precision.HIGHEST) + b.reshape(1, -1)
        h = _lrelu(h)
        h = h.astype(jnp.bfloat16).astype(jnp.float32)
    return h


if __name__ == "__main__":
    num_features = 16
    hidden_dims = (32, 32, 32)
    out_features = 8
    batch = 200  # deliberately not a multiple of the batch tile -> partial last block

    key = jax.random.PRNGKey(0)
    key, kx = jax.random.split(key)
    x = jax.random.normal(kx, (batch, num_features), jnp.float32)
    params = init_mlp_params(key, num_features, hidden_dims, out_features)

    # Pack once, reuse for every forward call (hoisted out of the jitted forward).
    w_p, b_p = pack_mlp_params(params)

    ref = mlp_reference(x, params)

    # Default tiling: 2 "parallel" grid steps at this size.
    out_default = jax.block_until_ready(
        mlp_forward(x, w_p, b_p, out_features=out_features))
    # Explicit small tile: 4 grid steps including a partial last block.
    out_tiled = jax.block_until_ready(
        mlp_forward(x, w_p, b_p, out_features=out_features, block_b=64))

    assert out_default.shape == (batch, out_features)
    assert out_tiled.shape == (batch, out_features)
    assert jnp.allclose(out_default, ref, atol=1e-2, rtol=1e-2)
    assert jnp.allclose(out_tiled, ref, atol=1e-2, rtol=1e-2)

    print("KERNEL_OK")
</pallas_src>

<mosaic_0001>
module attributes {stable_mosaic.version = 11 : i64} {
  func.func @mlp_kernel(%arg0: i32, %arg1: memref<104x16xf32, #tpu.memory_space<vmem>>, %arg2: memref<4x128x128xbf16, #tpu.memory_space<vmem>>, %arg3: memref<4x1x128xf32, #tpu.memory_space<vmem>>, %arg4: memref<104x8xf32, #tpu.memory_space<vmem>>) attributes {dimension_semantics = [#tpu.dimension_semantics<parallel>], iteration_bounds = array<i64: 2>, scalar_prefetch = 0 : i64, scratch_operands = 0 : i64, tpu.core_type = #tpu.core_type<tc>, window_params = [{transform_indices = @transform_0, window_bounds = array<i64: 104, 16>}, {pipeline_mode = #tpu.pipeline_mode<synchronous>, transform_indices = @transform_1, window_bounds = array<i64: 4, 128, 128>}, {pipeline_mode = #tpu.pipeline_mode<synchronous>, transform_indices = @transform_2, window_bounds = array<i64: 4, 1, 128>}, {transform_indices = @transform_3, window_bounds = array<i64: 104, 8>}]} {
    %c0 = arith.constant 0 : index
    %c0_0 = arith.constant 0 : index
    %0 = vector.load %arg1[%c0, %c0_0] : memref<104x16xf32, #tpu.memory_space<vmem>>, vector<104x16xf32>
    %1 = arith.truncf %0 : vector<104x16xf32> to vector<104x16xbf16>
    %c0_1 = arith.constant 0 : index
    %c0_2 = arith.constant 0 : index
    %c0_3 = arith.constant 0 : index
    %2 = vector.load %arg2[%c0_1, %c0_2, %c0_3] : memref<4x128x128xbf16, #tpu.memory_space<vmem>>, vector<1x128x128xbf16>
    %3 = vector.shape_cast %2 : vector<1x128x128xbf16> to vector<128x128xbf16>
    %4 = vector.extract_strided_slice %3 {offsets = [0, 0], sizes = [16, 128], strides = [1, 1]} : vector<128x128xbf16> to vector<16x128xbf16>
    %cst = arith.constant dense<0.000000e+00> : vector<104x128xf32>
    %5 = tpu.matmul %1, %4, %cst {dimension_numbers = #tpu.dot_dimension_numbers<[1], [0], [0], [1], [0, 0, 1, 1], [], []>} : vector<104x16xbf16>, vector<16x128xbf16>, vector<104x128xf32> -> vector<104x128xf32>
    %c0_4 = arith.constant 0 : index
    %c0_5 = arith.constant 0 : index
    %c0_6 = arith.constant 0 : index
    %6 = vector.load %arg3[%c0_4, %c0_5, %c0_6] : memref<4x1x128xf32, #tpu.memory_space<vmem>>, vector<1x1x128xf32>
    %7 = vector.shape_cast %6 : vector<1x1x128xf32> to vector<1x128xf32>
    %8 = vector.broadcast %7 : vector<1x128xf32> to vector<104x128xf32>
    %9 = arith.addf %5, %8 : vector<104x128xf32>
    %cst_7 = arith.constant 0.000000e+00 : f32
    %10 = vector.broadcast %cst_7 : f32 to vector<104x128xf32>
    %11 = arith.cmpf oge, %9, %10 : vector<104x128xf32>
    %cst_8 = arith.constant 0.00999999977 : f32
    %12 = vector.broadcast %cst_8 : f32 to vector<104x128xf32>
    %13 = arith.mulf %12, %9 : vector<104x128xf32>
    %14 = arith.select %11, %9, %13 : vector<104x128xi1>, vector<104x128xf32>
    %15 = arith.truncf %14 : vector<104x128xf32> to vector<104x128xbf16>
    %c1 = arith.constant 1 : index
    %c0_9 = arith.constant 0 : index
    %c0_10 = arith.constant 0 : index
    %16 = vector.load %arg2[%c1, %c0_9, %c0_10] : memref<4x128x128xbf16, #tpu.memory_space<vmem>>, vector<1x128x128xbf16>
    %17 = vector.shape_cast %16 : vector<1x128x128xbf16> to vector<128x128xbf16>
    %cst_11 = arith.constant dense<0.000000e+00> : vector<104x128xf32>
    %18 = tpu.matmul %15, %17, %cst_11 {dimension_numbers = #tpu.dot_dimension_numbers<[1], [0], [0], [1], [0, 0, 1, 1], [], []>} : vector<104x128xbf16>, vector<128x128xbf16>, vector<104x128xf32> -> vector<104x128xf32>
    %c1_12 = arith.constant 1 : index
    %c0_13 = arith.constant 0 : index
    %c0_14 = arith.constant 0 : index
    %19 = vector.load %arg3[%c1_12, %c0_13, %c0_14] : memref<4x1x128xf32, #tpu.memory_space<vmem>>, vector<1x1x128xf32>
    %20 = vector.shape_cast %19 : vector<1x1x128xf32> to vector<1x128xf32>
    %21 = vector.broadcast %20 : vector<1x128xf32> to vector<104x128xf32>
    %22 = arith.addf %18, %21 : vector<104x128xf32>
    %cst_15 = arith.constant 0.000000e+00 : f32
    %23 = vector.broadcast %cst_15 : f32 to vector<104x128xf32>
    %24 = arith.cmpf oge, %22, %23 : vector<104x128xf32>
    %cst_16 = arith.constant 0.00999999977 : f32
    %25 = vector.broadcast %cst_16 : f32 to vector<104x128xf32>
    %26 = arith.mulf %25, %22 : vector<104x128xf32>
    %27 = arith.select %24, %22, %26 : vector<104x128xi1>, vector<104x128xf32>
    %28 = arith.truncf %27 : vector<104x128xf32> to vector<104x128xbf16>
    %c2 = arith.constant 2 : index
    %c0_17 = arith.constant 0 : index
    %c0_18 = arith.constant 0 : index
    %29 = vector.load %arg2[%c2, %c0_17, %c0_18] : memref<4x128x128xbf16, #tpu.memory_space<vmem>>, vector<1x128x128xbf16>
    %30 = vector.shape_cast %29 : vector<1x128x128xbf16> to vector<128x128xbf16>
    %cst_19 = arith.constant dense<0.000000e+00> : vector<104x128xf32>
    %31 = tpu.matmul %28, %30, %cst_19 {dimension_numbers = #tpu.dot_dimension_numbers<[1], [0], [0], [1], [0, 0, 1, 1], [], []>} : vector<104x128xbf16>, vector<128x128xbf16>, vector<104x128xf32> -> vector<104x128xf32>
    %c2_20 = arith.constant 2 : index
    %c0_21 = arith.constant 0 : index
    %c0_22 = arith.constant 0 : index
    %32 = vector.load %arg3[%c2_20, %c0_21, %c0_22] : memref<4x1x128xf32, #tpu.memory_space<vmem>>, vector<1x1x128xf32>
    %33 = vector.shape_cast %32 : vector<1x1x128xf32> to vector<1x128xf32>
    %34 = vector.broadcast %33 : vector<1x128xf32> to vector<104x128xf32>
    %35 = arith.addf %31, %34 : vector<104x128xf32>
    %cst_23 = arith.constant 0.000000e+00 : f32
    %36 = vector.broadcast %cst_23 : f32 to vector<104x128xf32>
    %37 = arith.cmpf oge, %35, %36 : vector<104x128xf32>
    %cst_24 = arith.constant 0.00999999977 : f32
    %38 = vector.broadcast %cst_24 : f32 to vector<104x128xf32>
    %39 = arith.mulf %38, %35 : vector<104x128xf32>
    %40 = arith.select %37, %35, %39 : vector<104x128xi1>, vector<104x128xf32>
    %41 = arith.truncf %40 : vector<104x128xf32> to vector<104x128xbf16>
    %c3 = arith.constant 3 : index
    %c0_25 = arith.constant 0 : index
    %c0_26 = arith.constant 0 : index
    %42 = vector.load %arg2[%c3, %c0_25, %c0_26] : memref<4x128x128xbf16, #tpu.memory_space<vmem>>, vector<1x128x128xbf16>
    %43 = vector.shape_cast %42 : vector<1x128x128xbf16> to vector<128x128xbf16>
    %cst_27 = arith.constant dense<0.000000e+00> : vector<104x128xf32>
    %44 = tpu.matmul %41, %43, %cst_27 {dimension_numbers = #tpu.dot_dimension_numbers<[1], [0], [0], [1], [0, 0, 1, 1], [], []>} : vector<104x128xbf16>, vector<128x128xbf16>, vector<104x128xf32> -> vector<104x128xf32>
    %c3_28 = arith.constant 3 : index
    %c0_29 = arith.constant 0 : index
    %c0_30 = arith.constant 0 : index
    %45 = vector.load %arg3[%c3_28, %c0_29, %c0_30] : memref<4x1x128xf32, #tpu.memory_space<vmem>>, vector<1x1x128xf32>
    %46 = vector.shape_cast %45 : vector<1x1x128xf32> to vector<1x128xf32>
    %47 = vector.broadcast %46 : vector<1x128xf32> to vector<104x128xf32>
    %48 = arith.addf %44, %47 : vector<104x128xf32>
    %cst_31 = arith.constant 0.000000e+00 : f32
    %49 = vector.broadcast %cst_31 : f32 to vector<104x128xf32>
    %50 = arith.cmpf oge, %48, %49 : vector<104x128xf32>
    %cst_32 = arith.constant 0.00999999977 : f32
    %51 = vector.broadcast %cst_32 : f32 to vector<104x128xf32>
    %52 = arith.mulf %51, %48 : vector<104x128xf32>
    %53 = arith.select %50, %48, %52 : vector<104x128xi1>, vector<104x128xf32>
    %54 = vector.extract_strided_slice %53 {offsets = [0, 0], sizes = [104, 8], strides = [1, 1]} : vector<104x128xf32> to vector<104x8xf32>
    %c0_33 = arith.constant 0 : index
    %c0_34 = arith.constant 0 : index
    %55 = vector.load %arg4[%c0_33, %c0_34] : memref<104x8xf32, #tpu.memory_space<vmem>>, vector<104x8xf32>
    tpu.vector_store %arg4[%c0_33, %c0_34], %54 {strides = array<i32>} : memref<104x8xf32, #tpu.memory_space<vmem>>, vector<104x8xf32>,
    return
  }
  func.func @transform_0(%arg0: i32) -> (i32, i32) {
    %c0_i32 = arith.constant 0 : i32
    %c0_i32_0 = arith.constant 0 : i32
    return %arg0, %c0_i32 : i32, i32
  }
  func.func @transform_1(%arg0: i32) -> (i32, i32, i32) {
    %c0_i32 = arith.constant 0 : i32
    %c0_i32_0 = arith.constant 0 : i32
    %c0_i32_1 = arith.constant 0 : i32
    %c0_i32_2 = arith.constant 0 : i32
    return %c0_i32, %c0_i32_0, %c0_i32_1 : i32, i32, i32
  }
  func.func @transform_2(%arg0: i32) -> (i32, i32, i32) {
    %c0_i32 = arith.constant 0 : i32
    %c0_i32_0 = arith.constant 0 : i32
    %c0_i32_1 = arith.constant 0 : i32
    %c0_i32_2 = arith.constant 0 : i32
    return %c0_i32, %c0_i32_0, %c0_i32_1 : i32, i32, i32
  }
  func.func @transform_3(%arg0: i32) -> (i32, i32) {
    %c0_i32 = arith.constant 0 : i32
    %c0_i32_0 = arith.constant 0 : i32
    return %arg0, %c0_i32 : i32, i32
  }
}

</mosaic_0001>

<llo_original>
// kernel: mlp_forward.1
$region0: #{mlp_forward.1}
  #allocation0 [shape = 'u32[]', space=smem, size = 0x4, offset = 0x4, fixed_abs, tag = 'smem constant byte address 0x4 - core index']
  #allocation1 [shape = 'u32[144,128]{1,0:T(1,128)}', space=vmem, size = 0x12000, scoped, tag = 'internal scratch']
  %s0 = inlined_call_operand.vmem [shape: f32[200,16], index: 0, kind: input, shape index: {}]
  %s1 = inlined_call_operand.hbm [shape: bf16[4,128,128], index: 1, kind: input, shape index: {}]
  %s2 = inlined_call_operand.vmem [shape: f32[4,1,128], index: 2, kind: input, shape index: {}]
  %s3 = inlined_call_operand.vmem [shape: f32[200,8], index: 3, kind: output, shape index: {}]
  %s4 = sld [smem:[#allocation0]]
  $region97: #{mlp_forward.1} parent=0
    _
  %s6 = ssub.s32 1, %s4
  %s7 = scalar_select 0, %s6, %s4
  $region1: #{mlp_forward.1} parent=0
    #allocation2 [shape = 'u8[131072]{0}', space=vmem, size = 0x20000, scoped, tag = 'input window, operand 1, single buffered']
    #allocation3 [shape = 's32[2]{0}', space=sflag, size = 0x8, scoped, tag = 'scoped memory for mlp_forward.1']
    #allocation4 [shape = 'u8[106496]{0}', space=vmem, size = 0x1a000, scoped, tag = 'output window, operand 0']
    %8 = vsyncpa [#allocation3], 0
    loop: start=0, step=1, limit=4
    $region2: #{mlp_forward.1} parent=1 // loop_pre_header
      _
    $region3: #{mlp_forward.1} parent=1 // loop_header
      %s10 = sphi 0, %s14
      %p11 = scmp.ge.s32.totalorder %s10, 4
      %s20 = sphi 0, %s22
      %s23 = sphi 0, %s20
      %s24 = sphi 0, %s23
      %s40 = sphi 0, %s24
      %s44 = sphi 0, %s44
      %s46 = sphi 0, %s44
      %s47 = sphi 0, %s46
      %s61 = sphi 0, %s47
      %s65 = sphi 0, %s65
      %s67 = sphi 0, %s65
      %s68 = sphi 0, %s67
      %s82 = sphi 0, %s68
      %s88 = sphi 0, %s90
      %s91 = sphi 0, %s88
      %s92 = sphi 0, %s91
      %s108 = sphi 0, %s92
    $region4: #{mlp_forward.1} parent=1 // loop_header_branch
      %13 = sbr.rel (%p11) target = $region8
    $region5: #{mlp_forward.1} parent=1 // loop_body
      %s15 = ssub.s32 %s10, 1
      %s16 = ssub.s32 %s10, 2
      %s17 = sadd.s32 %s10, 1
      %s18 = ssub.s32 %s10, %s17
      %p19 = scmp.eq.s32.totalorder %s18, 0
      %s21 = sadd.s32 %s20, 1
      %s22 = scalar_select %p19, %s20, %s21
      %p25 = pneg %p19
      %p26 = scmp.eq.s32.totalorder %s10, 1
      %p27 = por %p25, %p26
      %p28 = scmp.ne.s32.totalorder %s20, %s23
      %p29 = scmp.eq.s32.totalorder %s10, 0
      %p30 = por %p28, %p29
      %p31 = scmp.ne.s32.totalorder %s20, %s23
      %p32 = scmp.eq.s32.totalorder %s15, 1
      %p33 = por %p31, %p32
      %p34 = scmp.ne.s32.totalorder %s23, %s24
      %p35 = scmp.eq.s32.totalorder %s15, 0
      %p36 = por %p34, %p35
      %p37 = scmp.ne.s32.totalorder %s23, %s24
      %p38 = scmp.eq.s32.totalorder %s16, 1
      %p39 = por %p37, %p38
      %p41 = scmp.ne.s32.totalorder %s24, %s40
      %p42 = scmp.eq.s32.totalorder %s16, 0
      %p43 = por %p41, %p42
      %s45 = sadd.s32 %s44, 1
      %p48 = scmp.eq.s32.totalorder %s10, 1
      %p49 = scmp.ne.s32.totalorder %s44, %s46
      %p50 = scmp.eq.s32.totalorder %s10, 0
      %p51 = por %p49, %p50
      %p52 = scmp.ne.s32.totalorder %s44, %s46
      %p53 = scmp.eq.s32.totalorder %s15, 1
      %p54 = por %p52, %p53
      %p55 = scmp.ne.s32.totalorder %s46, %s47
      %p56 = scmp.eq.s32.totalorder %s15, 0
      %p57 = por %p55, %p56
      %p58 = scmp.ne.s32.totalorder %s46, %s47
      %p59 = scmp.eq.s32.totalorder %s16, 1
      %p60 = por %p58, %p59
      %p62 = scmp.ne.s32.totalorder %s47, %s61
      %p63 = scmp.eq.s32.totalorder %s16, 0
      %p64 = por %p62, %p63
      %s66 = sadd.s32 %s65, 1
      %p69 = scmp.eq.s32.totalorder %s10, 1
      %p70 = scmp.ne.s32.totalorder %s65, %s67
      %p71 = scmp.eq.s32.totalorder %s10, 0
      %p72 = por %p70, %p71
      %p73 = scmp.ne.s32.totalorder %s65, %s67
      %p74 = scmp.eq.s32.totalorder %s15, 1
      %p75 = por %p73, %p74
      %p76 = scmp.ne.s32.totalorder %s67, %s68
      %p77 = scmp.eq.s32.totalorder %s15, 0
      %p78 = por %p76, %p77
      %p79 = scmp.ne.s32.totalorder %s67, %s68
      %p80 = scmp.eq.s32.totalorder %s16, 1
      %p81 = por %p79, %p80
      %p83 = scmp.ne.s32.totalorder %s68, %s82
      %p84 = scmp.eq.s32.totalorder %s16, 0
      %p85 = por %p83, %p84
      %s86 = ssub.s32 %s10, %s17
      %p87 = scmp.eq.s32.totalorder %s86, 0
      %s89 = sadd.s32 %s88, 1
      %s90 = scalar_select %p87, %s88, %s89
      %p93 = pneg %p87
      %p94 = scmp.eq.s32.totalorder %s10, 1
      %p95 = por %p93, %p94
      %p96 = scmp.ne.s32.totalorder %s88, %s91
      %p97 = scmp.eq.s32.totalorder %s10, 0
      %p98 = por %p96, %p97
      %p99 = scmp.ne.s32.totalorder %s88, %s91
      %p100 = scmp.eq.s32.totalorder %s15, 1
      %p101 = por %p99, %p100
      %p102 = scmp.ne.s32.totalorder %s91, %s92
      %p103 = scmp.eq.s32.totalorder %s15, 0
      %p104 = por %p102, %p103
      %p105 = scmp.ne.s32.totalorder %s91, %s92
      %p106 = scmp.eq.s32.totalorder %s16, 1
      %p107 = por %p105, %p106
      %p109 = scmp.ne.s32.totalorder %s92, %s108
      %p110 = scmp.eq.s32.totalorder %s16, 0
      %p111 = por %p109, %p110
      %p112 = scmp.le.s32.totalorder 1, %s10
      %p113 = scmp.lt.s32.totalorder %s10, 3
      %p114 = pnand %p112, %p113
      %p115 = pneg %p114
      // Predicated region
      $region9: #{mlp_forward.1} parent=5 // pred_check
        _
      $region10: #{mlp_forward.1} parent=5 // pred_check_branch
        %117 = sbr.rel (%p114) target = $region12
      $region11: #{mlp_forward.1} parent=5 // pred_region
        %s118 = ssub.s32 %s10, 1
        // Predicated region
        $region13: #{mlp_forward.1} parent=11 // pred_check
          %p119 = pneg %p57
        $region14: #{mlp_forward.1} parent=11 // pred_check_branch
          %121 = sbr.rel (%p119) target = $region16
        $region15: #{mlp_forward.1} parent=11 // pred_region
          %s123 = ssub.s32 4096, 4096
          %124 = vsyncadd [#allocation3], %s123
          %s125 = sshll.u32 [#allocation2], 4
          %s126 = int_to_ptr.vmem [resolvable:$true] %s125
          %131 = dma.hbm_to_vmem [thread:$0]  %s1, 4096, %s126, [#allocation3], 64, 64, 4
        $region16: #{mlp_forward.1} parent=11 // pred_fallthru
          _
        // Predicated region
        $region17: #{mlp_forward.1} parent=11 // pred_check
          %p132 = pneg %p78
        $region18: #{mlp_forward.1} parent=11 // pred_check_branch
          %134 = sbr.rel (%p132) target = $region20
        $region19: #{mlp_forward.1} parent=11 // pred_region
          _
        $region20: #{mlp_forward.1} parent=11 // pred_fallthru
          _
      $region12: #{mlp_forward.1} parent=5 // pred_fallthru
        _
      %p135 = scmp.lt.s32.totalorder %s10, 2
      // Predicated region
      $region21: #{mlp_forward.1} parent=5 // pred_check
        %p136 = pneg %p135
      $region22: #{mlp_forward.1} parent=5 // pred_check_branch
        %138 = sbr.rel (%p136) target = $region24
      $region23: #{mlp_forward.1} parent=5 // pred_region
        // Predicated region
        $region25: #{mlp_forward.1} parent=23 // pred_check
          %p139 = pneg %p30
        $region26: #{mlp_forward.1} parent=23 // pred_check_branch
          %141 = sbr.rel (%p139) target = $region28
        $region27: #{mlp_forward.1} parent=23 // pred_region
          %s142 = smul.u32 13, %s10
          %s143 = ssub.s32 25, %s142
          %p144 = scmp.lt.s32.totalorder %s143, 13
          %s145 = scalar_select %p144, %s143, 13
          %s146 = smul.u32 128, %s145
          %p147 = scmp.lt.s32.totalorder %s142, 24
          %s148 = scalar_select %p147, %s142, 24
          %s149 = smul.addr %s148, 8
          %s150 = scalar_lea.vmem %s0, %s149
          %s151 = smul.u32 13, %s10
          %s152 = ssub.s32 25, %s151
          %p153 = scmp.lt.s32.totalorder %s152, 13
          %s154 = scalar_select %p153, %s152, 13
          %s155 = smul.u32 128, %s154
        $region28: #{mlp_forward.1} parent=23 // pred_fallthru
          _
      $region24: #{mlp_forward.1} parent=5 // pred_fallthru
        _
      %p156 = scmp.le.s32.totalorder 1, %s10
      %p157 = scmp.lt.s32.totalorder %s10, 3
      %p158 = pnand %p156, %p157
      %p159 = pneg %p158
      // Predicated region
      $region29: #{mlp_forward.1} parent=5 // pred_check
        _
      $region30: #{mlp_forward.1} parent=5 // pred_check_branch
        %161 = sbr.rel (%p158) target = $region32
      $region31: #{mlp_forward.1} parent=5 // pred_region
        %s162 = ssub.s32 %s10, 1
        // Predicated region
        $region33: #{mlp_forward.1} parent=31 // pred_check
          %p163 = pneg %p57
        $region34: #{mlp_forward.1} parent=31 // pred_check_branch
          %165 = sbr.rel (%p163) target = $region36
        $region35: #{mlp_forward.1} parent=31 // pred_region
          %166 = dma.done [#allocation3], 4096
        $region36: #{mlp_forward.1} parent=31 // pred_fallthru
          _
        %s167 = smul.u32 13, %s15
        %s168 = ssub.s32 25, %s167
        %p169 = scmp.lt.s32.totalorder %s168, 13
        %s170 = scalar_select %p169, %s168, 13
        %s171 = smul.u32 128, %s170
        %p172 = scmp.lt.s32.totalorder %s167, 24
        %s173 = scalar_select %p172, %s167, 24
        %s174 = smul.addr %s173, 8
        %s175 = scalar_lea.vmem %s0, %s174
        %p176 = pneg %p36
        %p177 = pneg %p33
        %p178 = pneg %p57
        %p179 = pneg %p54
        %p180 = pneg %p78
        %p181 = pneg %p75
        %p182 = pneg %p104
        %p183 = pneg %p101
        %s184 = sand.u32 %s91, 1
        %s185 = sand.u32 %s91, 1
        %s186 = smul.addr %s185, 104
        %s187 = scalar_lea.vmem [#allocation4], %s186
        %s188 = smul.u32 13, %s15
        %s189 = ssub.s32 25, %s188
        %p190 = scmp.lt.s32.totalorder %s189, 13
        %s191 = scalar_select %p190, %s189, 13
        %s192 = smul.u32 128, %s191
        %p193 = scmp.lt.s32.totalorder %s188, 24
        %s194 = scalar_select %p193, %s188, 24
        %s195 = smul.addr %s194, 8
        %s196 = scalar_lea.vmem %s0, %s195
        %s197 = smul.u32 13, %s15
        %s198 = ssub.s32 25, %s197
        %p199 = scmp.lt.s32.totalorder %s198, 13
        %s200 = scalar_select %p199, %s198, 13
        %s201 = smul.u32 128, %s200
        %s202 = smul.u32 13, %s15
        %s203 = ssub.s32 25, %s202
        %p204 = scmp.lt.s32.totalorder %s203, 13
        %s205 = scalar_select %p204, %s203, 13
        %s206 = smul.u32 128, %s205
        %v208 = vld [vmem:[%s196] sm:$0xff]
        %v209 = vld [vmem:[%s196 + $0x8] sm:$0xff]
        %v210 = vld [vmem:[%s196 + $0x10] sm:$0xff]
        %v211 = vld [vmem:[%s196 + $0x18] sm:$0xff]
        %v212 = vld [vmem:[%s196 + $0x20] sm:$0xff]
        %v213 = vld [vmem:[%s196 + $0x28] sm:$0xff]
        %v214 = vld [vmem:[%s196 + $0x30] sm:$0xff]
        %v215 = vld [vmem:[%s196 + $0x38] sm:$0xff]
        %v216 = vld [vmem:[%s196 + $0x40] sm:$0xff]
        %v217 = vld [vmem:[%s196 + $0x48] sm:$0xff]
        %v218 = vld [vmem:[%s196 + $0x50] sm:$0xff]
        %v219 = vld [vmem:[%s196 + $0x58] sm:$0xff]
        %v220 = vld [vmem:[%s196 + $0x60] sm:$0xff]
        %v221 = vpack.c.bf16 %v209, %v208
        %v222 = vpack.c.bf16 %v211, %v210
        %v223 = vpack.c.bf16 %v213, %v212
        %v224 = vpack.c.bf16 %v215, %v214
        %v225 = vpack.c.bf16 %v217, %v216
        %v226 = vpack.c.bf16 %v219, %v218
        %v227 = vpack.c.bf16 %v220, %v220
        %v228 = vld [vmem:[#allocation2] sm:$0xf]
        %v229 = vld [vmem:[#allocation2 + $0x4] sm:$0xf]
        %v230 = vld [vmem:[%s2] sm:$0x1]
        %v232 = vlaneseq
        %v233 = vshrl.u32 %v232, 7
        %v234 = vsub.s32 0, %v233
        %v235 = vrot.slane %v230, %v234
        %v239 = vunpack.c.l.b16 %v228
        %v240 = vunpack.c.l.b16 %v229
        %v241 = vpack.c.b16 %v240, %v239
        %vm243 = vcmask 130048
        %v245 = vsel %vm243, %v221, 0
        %v248 = vsel %vm243, %v222, 0
        %v251 = vsel %vm243, %v223, 0
        %v254 = vsel %vm243, %v224, 0
        %v257 = vsel %vm243, %v225, 0
        %v260 = vsel %vm243, %v226, 0
        %v263 = vsel %vm243, %v227, 0
        %265 = vmatprep.subr.bf16.mxu0 0
        %266 = vmatpush1.bf16.msra.mxu0 %v241
        %267 = vmatprep.subr.bf16.mxu0 0
        %268 = vmatpush1.bf16.msra.mxu0 0
        %269 = vmatprep.subr.bf16.mxu0 0
        %270 = vmatpush1.bf16.msra.mxu0 0
        %271 = vmatprep.subr.bf16.mxu0 0
        %272 = vmatpush1.bf16.msra.mxu0 0
        %273 = vmatprep.subr.bf16.mxu0 0
        %274 = vmatpush1.bf16.msra.mxu0 0
        %275 = vmatprep.subr.bf16.mxu0 0
        %276 = vmatpush1.bf16.msra.mxu0 0
        %277 = vmatprep.subr.bf16.mxu0 0
        %278 = vmatpush1.bf16.msra.mxu0 0
        %279 = vmatprep.subr.bf16.mxu0 0
        %280 = vmatpush1.bf16.msra.mxu0 0
        %281 = vmatprep.subr.bf16.mxu0 0
        %282 = vmatpush1.bf16.msra.mxu0 0
        %283 = vmatprep.subr.bf16.mxu0 0
        %284 = vmatpush1.bf16.msra.mxu0 0
        %285 = vmatprep.subr.bf16.mxu0 0
        %286 = vmatpush1.bf16.msra.mxu0 0
        %287 = vmatprep.subr.bf16.mxu0 0
        %288 = vmatpush1.bf16.msra.mxu0 0
        %289 = vmatprep.subr.bf16.mxu0 0
        %290 = vmatpush1.bf16.msra.mxu0 0
        %291 = vmatprep.subr.bf16.mxu0 0
        %292 = vmatpush1.bf16.msra.mxu0 0
        %293 = vmatprep.subr.bf16.mxu0 0
        %294 = vmatpush1.bf16.msra.mxu0 0
        %295 = vmatprep.subr.bf16.mxu0 0
        %296 = vmatpush1.bf16.msra.mxu0 0
        %297 = vmatprep.mubr.bf16.mxu0 0
        %298 = vmatmul.mubr.bf16.gmra.mrb[0].mxu0 %v245
        %v299 = vpop.f32.mrb[0].mxu0
        %v300 = vadd.f32 %v235, %v299
        %v301 = vpop.f32.mrb[0].mxu0
        %v302 = vpop.f32.mrb[0].mxu0
        %v303 = vadd.f32 %v235, %v302
        %v304 = vpop.f32.mrb[0].mxu0
        %305 = vmatprep.mubr.bf16.mxu0 0
        %306 = vmatmul.mubr.bf16.gmra.mrb[0].mxu0 %v248
        %v307 = vpop.f32.mrb[0].mxu0
        %v308 = vadd.f32 %v235, %v307
        %v309 = vpop.f32.mrb[0].mxu0
        %v310 = vpop.f32.mrb[0].mxu0
        %v311 = vadd.f32 %v235, %v310
        %v312 = vpop.f32.mrb[0].mxu0
        %313 = vmatprep.mubr.bf16.mxu0 0
        %314 = vmatmul.mubr.bf16.gmra.mrb[0].mxu0 %v251
        %v315 = vpop.f32.mrb[0].mxu0
        %v316 = vadd.f32 %v235, %v315
        %v317 = vpop.f32.mrb[0].mxu0
        %v318 = vpop.f32.mrb[0].mxu0
        %v319 = vadd.f32 %v235, %v318
        %v320 = vpop.f32.mrb[0].mxu0
        %321 = vmatprep.mubr.bf16.mxu0 0
        %322 = vmatmul.mubr.bf16.gmra.mrb[0].mxu0 %v254
        %v323 = vpop.f32.mrb[0].mxu0
        %v324 = vadd.f32 %v235, %v323
        %v325 = vpop.f32.mrb[0].mxu0
        %v326 = vpop.f32.mrb[0].mxu0
        %v327 = vadd.f32 %v235, %v326
        %v328 = vpop.f32.mrb[0].mxu0
        %329 = vmatprep.mubr.bf16.mxu0 0
        %330 = vmatmul.mubr.bf16.gmra.mrb[0].mxu0 %v257
        %v331 = vpop.f32.mrb[0].mxu0
        %v332 = vadd.f32 %v235, %v331
        %v333 = vpop.f32.mrb[0].mxu0
        %v334 = vpop.f32.mrb[0].mxu0
        %v335 = vadd.f32 %v235, %v334
        %v336 = vpop.f32.mrb[0].mxu0
        %337 = vmatprep.mubr.bf16.mxu0 0
        %338 = vmatmul.mubr.bf16.gmra.mrb[0].mxu0 %v260
        %v339 = vpop.f32.mrb[0].mxu0
        %v340 = vadd.f32 %v235, %v339
        %v341 = vpop.f32.mrb[0].mxu0
        %v342 = vpop.f32.mrb[0].mxu0
        %v343 = vadd.f32 %v235, %v342
        %v344 = vpop.f32.mrb[0].mxu0
        %345 = vmatprep.mubr.bf16.mxu0 0
        %346 = vmatmul.mubr.bf16.gmra.mrb[0].mxu0 %v263
        %v347 = vpop.f32.mrb[0].mxu0
        %v348 = vadd.f32 %v235, %v347
        %v349 = vpop.f32.mrb[0].mxu0
        %v350 = vpop.f32.mrb[0].mxu0
        %v351 = vpop.f32.mrb[0].mxu0
        %352 = vdwg.mxu0
        %vm353 = vcmp.ge.f32.partialorder %v300, 0.0
        %vm354 = vcmp.ge.f32.partialorder %v303, 0.0
        %vm355 = vcmp.ge.f32.partialorder %v308, 0.0
        %vm356 = vcmp.ge.f32.partialorder %v311, 0.0
        %vm357 = vcmp.ge.f32.partialorder %v316, 0.0
        %vm358 = vcmp.ge.f32.partialorder %v319, 0.0
        %vm359 = vcmp.ge.f32.partialorder %v324, 0.0
        %vm360 = vcmp.ge.f32.partialorder %v327, 0.0
        %vm361 = vcmp.ge.f32.partialorder %v332, 0.0
        %vm362 = vcmp.ge.f32.partialorder %v335, 0.0
        %vm363 = vcmp.ge.f32.partialorder %v340, 0.0
        %vm364 = vcmp.ge.f32.partialorder %v343, 0.0
        %vm365 = vcmp.ge.f32.partialorder %v348, 0.0
        %v366 = vmul.f32 %v300, 0.01
        %v367 = vmul.f32 %v303, 0.01
        %v368 = vmul.f32 %v308, 0.01
        %v369 = vmul.f32 %v311, 0.01
        %v370 = vmul.f32 %v316, 0.01
        %v371 = vmul.f32 %v319, 0.01
        %v372 = vmul.f32 %v324, 0.01
        %v373 = vmul.f32 %v327, 0.01
        %v374 = vmul.f32 %v332, 0.01
        %v375 = vmul.f32 %v335, 0.01
        %v376 = vmul.f32 %v340, 0.01
        %v377 = vmul.f32 %v343, 0.01
        %v378 = vmul.f32 %v348, 0.01
        %v379 = vsel %vm353, %v300, %v366
        %v380 = vsel %vm354, %v303, %v367
        %v381 = vsel %vm355, %v308, %v368
        %v382 = vsel %vm356, %v311, %v369
        %v383 = vsel %vm357, %v316, %v370
        %v384 = vsel %vm358, %v319, %v371
        %v385 = vsel %vm359, %v324, %v372
        %v386 = vsel %vm360, %v327, %v373
        %v387 = vsel %vm361, %v332, %v374
        %v388 = vsel %vm362, %v335, %v375
        %v389 = vsel %vm363, %v340, %v376
        %v390 = vsel %vm364, %v343, %v377
        %v391 = vsel %vm365, %v348, %v378
        %v392 = vpack.c.bf16 %v380, %v379
        %v393 = vpack.c.bf16 %v382, %v381
        %v394 = vpack.c.bf16 %v384, %v383
        %v395 = vpack.c.bf16 %v386, %v385
        %v396 = vpack.c.bf16 %v388, %v387
        %v397 = vpack.c.bf16 %v390, %v389
        %v398 = vpack.c.bf16 %v391, %v391
        %s399 = scalar_lea.vmem [#allocation2], 64
        %v400 = vld [vmem:[%s399] sm:$0xf]
        %v401 = vld [vmem:[%s399 + $0x4] sm:$0xf]
        %v402 = vld [vmem:[%s399 + $0x8] sm:$0xf]
        %v403 = vld [vmem:[%s399 + $0xc] sm:$0xf]
        %v404 = vld [vmem:[%s399 + $0x10] sm:$0xf]
        %v405 = vld [vmem:[%s399 + $0x14] sm:$0xf]
        %v406 = vld [vmem:[%s399 + $0x18] sm:$0xf]
        %v407 = vld [vmem:[%s399 + $0x1c] sm:$0xf]
        %v408 = vld [vmem:[%s399 + $0x20] sm:$0xf]
        %v409 = vld [vmem:[%s399 + $0x24] sm:$0xf]
        %v410 = vld [vmem:[%s399 + $0x28] sm:$0xf]
        %v411 = vld [vmem:[%s399 + $0x2c] sm:$0xf]
        %v412 = vld [vmem:[%s399 + $0x30] sm:$0xf]
        %v413 = vld [vmem:[%s399 + $0x34] sm:$0xf]
        %v414 = vld [vmem:[%s399 + $0x38] sm:$0xf]
        %v415 = vld [vmem:[%s399 + $0x3c] sm:$0xf]
        %s416 = scalar_lea.vmem %s2, 1
        %v417 = vld [vmem:[%s416] sm:$0x1]
        %v419 = vlaneseq
        %v420 = vshrl.u32 %v419, 7
        %v421 = vsub.s32 0, %v420
        %v422 = vrot.slane %v417, %v421
        %v440 = vunpack.c.l.b16 %v400
        %v441 = vunpack.c.l.b16 %v401
        %v442 = vunpack.c.l.b16 %v402
        %v443 = vunpack.c.l.b16 %v403
        %v444 = vunpack.c.l.b16 %v404
        %v445 = vunpack.c.l.b16 %v405
        %v446 = vunpack.c.l.b16 %v406
        %v447 = vunpack.c.l.b16 %v407
        %v448 = vunpack.c.l.b16 %v408
        %v449 = vunpack.c.l.b16 %v409
        %v450 = vunpack.c.l.b16 %v410
        %v451 = vunpack.c.l.b16 %v411
        %v452 = vunpack.c.l.b16 %v412
        %v453 = vunpack.c.l.b16 %v413
        %v454 = vunpack.c.l.b16 %v414
        %v455 = vunpack.c.l.b16 %v415
        %v456 = vpack.c.b16 %v441, %v440
        %v457 = vpack.c.b16 %v443, %v442
        %v458 = vpack.c.b16 %v445, %v444
        %v459 = vpack.c.b16 %v447, %v446
        %v460 = vpack.c.b16 %v449, %v448
        %v461 = vpack.c.b16 %v451, %v450
        %v462 = vpack.c.b16 %v453, %v452
        %v463 = vpack.c.b16 %v455, %v454
        %472 = vmatprep.subr.bf16.mxu0 0
        %473 = vmatpush1.bf16.msra.mxu0 %v456
        %474 = vmatprep.subr.bf16.mxu0 0
        %475 = vmatpush1.bf16.msra.mxu0 %v457
        %476 = vmatprep.subr.bf16.mxu0 0
        %477 = vmatpush1.bf16.msra.mxu0 %v458
        %478 = vmatprep.subr.bf16.mxu0 0
        %479 = vmatpush1.bf16.msra.mxu0 %v459
        %480 = vmatprep.subr.bf16.mxu0 0
        %481 = vmatpush1.bf16.msra.mxu0 %v460
        %482 = vmatprep.subr.bf16.mxu0 0
        %483 = vmatpush1.bf16.msra.mxu0 %v461
        %484 = vmatprep.subr.bf16.mxu0 0
        %485 = vmatpush1.bf16.msra.mxu0 %v462
        %486 = vmatprep.subr.bf16.mxu0 0
        %487 = vmatpush1.bf16.msra.mxu0 %v463
        %488 = vmatprep.subr.bf16.mxu0 0
        %489 = vmatpush1.bf16.msra.mxu0 0
        %490 = vmatprep.subr.bf16.mxu0 0
        %491 = vmatpush1.bf16.msra.mxu0 0
        %492 = vmatprep.subr.bf16.mxu0 0
        %493 = vmatpush1.bf16.msra.mxu0 0
        %494 = vmatprep.subr.bf16.mxu0 0
        %495 = vmatpush1.bf16.msra.mxu0 0
        %496 = vmatprep.subr.bf16.mxu0 0
        %497 = vmatpush1.bf16.msra.mxu0 0
        %498 = vmatprep.subr.bf16.mxu0 0
        %499 = vmatpush1.bf16.msra.mxu0 0
        %500 = vmatprep.subr.bf16.mxu0 0
        %501 = vmatpush1.bf16.msra.mxu0 0
        %502 = vmatprep.subr.bf16.mxu0 0
        %503 = vmatpush1.bf16.msra.mxu0 0
        %504 = vmatprep.mubr.bf16.mxu0 0
        %505 = vmatmul.mubr.bf16.gmra.mrb[0].mxu0 %v392
        %v506 = vpop.f32.mrb[0].mxu0
        %v507 = vadd.f32 %v422, %v506
        %v508 = vpop.f32.mrb[0].mxu0
        %v509 = vpop.f32.mrb[0].mxu0
        %v510 = vadd.f32 %v422, %v509
        %v511 = vpop.f32.mrb[0].mxu0
        %512 = vmatprep.mubr.bf16.mxu0 0
        %513 = vmatmul.mubr.bf16.gmra.mrb[0].mxu0 %v393
        %v514 = vpop.f32.mrb[0].mxu0
        %v515 = vadd.f32 %v422, %v514
        %v516 = vpop.f32.mrb[0].mxu0
        %v517 = vpop.f32.mrb[0].mxu0
        %v518 = vadd.f32 %v422, %v517
        %v519 = vpop.f32.mrb[0].mxu0
        %520 = vmatprep.mubr.bf16.mxu0 0
        %521 = vmatmul.mubr.bf16.gmra.mrb[0].mxu0 %v394
        %v522 = vpop.f32.mrb[0].mxu0
        %v523 = vadd.f32 %v422, %v522
        %v524 = vpop.f32.mrb[0].mxu0
        %v525 = vpop.f32.mrb[0].mxu0
        %v526 = vadd.f32 %v422, %v525
        %v527 = vpop.f32.mrb[0].mxu0
        %528 = vmatprep.mubr.bf16.mxu0 0
        %529 = vmatmul.mubr.bf16.gmra.mrb[0].mxu0 %v395
        %v530 = vpop.f32.mrb[0].mxu0
        %v531 = vadd.f32 %v422, %v530
        %v532 = vpop.f32.mrb[0].mxu0
        %v533 = vpop.f32.mrb[0].mxu0
        %v534 = vadd.f32 %v422, %v533
        %v535 = vpop.f32.mrb[0].mxu0
        %536 = vmatprep.mubr.bf16.mxu0 0
        %537 = vmatmul.mubr.bf16.gmra.mrb[0].mxu0 %v396
        %v538 = vpop.f32.mrb[0].mxu0
        %v539 = vadd.f32 %v422, %v538
        %v540 = vpop.f32.mrb[0].mxu0
        %v541 = vpop.f32.mrb[0].mxu0
        %v542 = vadd.f32 %v422, %v541
        %v543 = vpop.f32.mrb[0].mxu0
        %544 = vmatprep.mubr.bf16.mxu0 0
        %545 = vmatmul.mubr.bf16.gmra.mrb[0].mxu0 %v397
        %v546 = vpop.f32.mrb[0].mxu0
        %v547 = vadd.f32 %v422, %v546
        %v548 = vpop.f32.mrb[0].mxu0
        %v549 = vpop.f32.mrb[0].mxu0
        %v550 = vadd.f32 %v422, %v549
        %v551 = vpop.f32.mrb[0].mxu0
        %552 = vmatprep.mubr.bf16.mxu0 0
        %553 = vmatmul.mubr.bf16.gmra.mrb[0].mxu0 %v398
        %v554 = vpop.f32.mrb[0].mxu0
        %v555 = vadd.f32 %v422, %v554
        %v556 = vpop.f32.mrb[0].mxu0
        %v557 = vpop.f32.mrb[0].mxu0
        %v558 = vpop.f32.mrb[0].mxu0
        %559 = vdwg.mxu0
        %vm560 = vcmp.ge.f32.partialorder %v507, 0.0
        %vm561 = vcmp.ge.f32.partialorder %v510, 0.0
        %vm562 = vcmp.ge.f32.partialorder %v515, 0.0
        %vm563 = vcmp.ge.f32.partialorder %v518, 0.0
        %vm564 = vcmp.ge.f32.partialorder %v523, 0.0
        %vm565 = vcmp.ge.f32.partialorder %v526, 0.0
        %vm566 = vcmp.ge.f32.partialorder %v531, 0.0
        %vm567 = vcmp.ge.f32.partialorder %v534, 0.0
        %vm568 = vcmp.ge.f32.partialorder %v539, 0.0
        %vm569 = vcmp.ge.f32.partialorder %v542, 0.0
        %vm570 = vcmp.ge.f32.partialorder %v547, 0.0
        %vm571 = vcmp.ge.f32.partialorder %v550, 0.0
        %vm572 = vcmp.ge.f32.partialorder %v555, 0.0
        %v573 = vmul.f32 %v507, 0.01
        %v574 = vmul.f32 %v510, 0.01
        %v575 = vmul.f32 %v515, 0.01
        %v576 = vmul.f32 %v518, 0.01
        %v577 = vmul.f32 %v523, 0.01
        %v578 = vmul.f32 %v526, 0.01
        %v579 = vmul.f32 %v531, 0.01
        %v580 = vmul.f32 %v534, 0.01
        %v581 = vmul.f32 %v539, 0.01
        %v582 = vmul.f32 %v542, 0.01
        %v583 = vmul.f32 %v547, 0.01
        %v584 = vmul.f32 %v550, 0.01
        %v585 = vmul.f32 %v555, 0.01
        %v586 = vsel %vm560, %v507, %v573
        %v587 = vsel %vm561, %v510, %v574
        %v588 = vsel %vm562, %v515, %v575
        %v589 = vsel %vm563, %v518, %v576
        %v590 = vsel %vm564, %v523, %v577
        %v591 = vsel %vm565, %v526, %v578
        %v592 = vsel %vm566, %v531, %v579
        %v593 = vsel %vm567, %v534, %v580
        %v594 = vsel %vm568, %v539, %v581
        %v595 = vsel %vm569, %v542, %v582
        %v596 = vsel %vm570, %v547, %v583
        %v597 = vsel %vm571, %v550, %v584
        %v598 = vsel %vm572, %v555, %v585
        %v599 = vpack.c.bf16 %v587, %v586
        %v600 = vpack.c.bf16 %v589, %v588
        %v601 = vpack.c.bf16 %v591, %v590
        %v602 = vpack.c.bf16 %v593, %v592
        %v603 = vpack.c.bf16 %v595, %v594
        %v604 = vpack.c.bf16 %v597, %v596
        %v605 = vpack.c.bf16 %v598, %v598
        %s606 = scalar_lea.vmem [#allocation2], 128
        %v607 = vld [vmem:[%s606] sm:$0xf]
        %v608 = vld [vmem:[%s606 + $0x4] sm:$0xf]
        %v609 = vld [vmem:[%s606 + $0x8] sm:$0xf]
        %v610 = vld [vmem:[%s606 + $0xc] sm:$0xf]
        %v611 = vld [vmem:[%s606 + $0x10] sm:$0xf]
        %v612 = vld [vmem:[%s606 + $0x14] sm:$0xf]
        %v613 = vld [vmem:[%s606 + $0x18] sm:$0xf]
        %v614 = vld [vmem:[%s606 + $0x1c] sm:$0xf]
        %v615 = vld [vmem:[%s606 + $0x20] sm:$0xf]
        %v616 = vld [vmem:[%s606 + $0x24] sm:$0xf]
        %v617 = vld [vmem:[%s606 + $0x28] sm:$0xf]
        %v618 = vld [vmem:[%s606 + $0x2c] sm:$0xf]
        %v619 = vld [vmem:[%s606 + $0x30] sm:$0xf]
        %v620 = vld [vmem:[%s606 + $0x34] sm:$0xf]
        %v621 = vld [vmem:[%s606 + $0x38] sm:$0xf]
        %v622 = vld [vmem:[%s606 + $0x3c] sm:$0xf]
        %s623 = scalar_lea.vmem %s2, 2
        %v624 = vld [vmem:[%s623] sm:$0x1]
        %v626 = vlaneseq
        %v627 = vshrl.u32 %v626, 7
        %v628 = vsub.s32 0, %v627
        %v629 = vrot.slane %v624, %v628
        %v647 = vunpack.c.l.b16 %v607
        %v648 = vunpack.c.l.b16 %v608
        %v649 = vunpack.c.l.b16 %v609
        %v650 = vunpack.c.l.b16 %v610
        %v651 = vunpack.c.l.b16 %v611
        %v652 = vunpack.c.l.b16 %v612
        %v653 = vunpack.c.l.b16 %v613
        %v654 = vunpack.c.l.b16 %v614
        %v655 = vunpack.c.l.b16 %v615
        %v656 = vunpack.c.l.b16 %v616
        %v657 = vunpack.c.l.b16 %v617
        %v658 = vunpack.c.l.b16 %v618
        %v659 = vunpack.c.l.b16 %v619
        %v660 = vunpack.c.l.b16 %v620
        %v661 = vunpack.c.l.b16 %v621
        %v662 = vunpack.c.l.b16 %v622
        %v663 = vpack.c.b16 %v648, %v647
        %v664 = vpack.c.b16 %v650, %v649
        %v665 = vpack.c.b16 %v652, %v651
        %v666 = vpack.c.b16 %v654, %v653
        %v667 = vpack.c.b16 %v656, %v655
        %v668 = vpack.c.b16 %v658, %v657
        %v669 = vpack.c.b16 %v660, %v659
        %v670 = vpack.c.b16 %v662, %v661
        %679 = vmatprep.subr.bf16.mxu0 0
        %680 = vmatpush1.bf16.msra.mxu0 %v663
        %681 = vmatprep.subr.bf16.mxu0 0
        %682 = vmatpush1.bf16.msra.mxu0 %v664
        %683 = vmatprep.subr.bf16.mxu0 0
        %684 = vmatpush1.bf16.msra.mxu0 %v665
        %685 = vmatprep.subr.bf16.mxu0 0
        %686 = vmatpush1.bf16.msra.mxu0 %v666
        %687 = vmatprep.subr.bf16.mxu0 0
        %688 = vmatpush1.bf16.msra.mxu0 %v667
        %689 = vmatprep.subr.bf16.mxu0 0
        %690 = vmatpush1.bf16.msra.mxu0 %v668
        %691 = vmatprep.subr.bf16.mxu0 0
        %692 = vmatpush1.bf16.msra.mxu0 %v669
        %693 = vmatprep.subr.bf16.mxu0 0
        %694 = vmatpush1.bf16.msra.mxu0 %v670
        %695 = vmatprep.subr.bf16.mxu0 0
        %696 = vmatpush1.bf16.msra.mxu0 0
        %697 = vmatprep.subr.bf16.mxu0 0
        %698 = vmatpush1.bf16.msra.mxu0 0
        %699 = vmatprep.subr.bf16.mxu0 0
        %700 = vmatpush1.bf16.msra.mxu0 0
        %701 = vmatprep.subr.bf16.mxu0 0
        %702 = vmatpush1.bf16.msra.mxu0 0
        %703 = vmatprep.subr.bf16.mxu0 0
        %704 = vmatpush1.bf16.msra.mxu0 0
        %705 = vmatprep.subr.bf16.mxu0 0
        %706 = vmatpush1.bf16.msra.mxu0 0
        %707 = vmatprep.subr.bf16.mxu0 0
        %708 = vmatpush1.bf16.msra.mxu0 0
        %709 = vmatprep.subr.bf16.mxu0 0
        %710 = vmatpush1.bf16.msra.mxu0 0
        %711 = vmatprep.mubr.bf16.mxu0 0
        %712 = vmatmul.mubr.bf16.gmra.mrb[0].mxu0 %v599
        %v713 = vpop.f32.mrb[0].mxu0
        %v714 = vadd.f32 %v629, %v713
        %v715 = vpop.f32.mrb[0].mxu0
        %v716 = vpop.f32.mrb[0].mxu0
        %v717 = vadd.f32 %v629, %v716
        %v718 = vpop.f32.mrb[0].mxu0
        %719 = vmatprep.mubr.bf16.mxu0 0
        %720 = vmatmul.mubr.bf16.gmra.mrb[0].mxu0 %v600
        %v721 = vpop.f32.mrb[0].mxu0
        %v722 = vadd.f32 %v629, %v721
        %v723 = vpop.f32.mrb[0].mxu0
        %v724 = vpop.f32.mrb[0].mxu0
        %v725 = vadd.f32 %v629, %v724
        %v726 = vpop.f32.mrb[0].mxu0
        %727 = vmatprep.mubr.bf16.mxu0 0
        %728 = vmatmul.mubr.bf16.gmra.mrb[0].mxu0 %v601
        %v729 = vpop.f32.mrb[0].mxu0
        %v730 = vadd.f32 %v629, %v729
        %v731 = vpop.f32.mrb[0].mxu0
        %v732 = vpop.f32.mrb[0].mxu0
        %v733 = vadd.f32 %v629, %v732
        %v734 = vpop.f32.mrb[0].mxu0
        %735 = vmatprep.mubr.bf16.mxu0 0
        %736 = vmatmul.mubr.bf16.gmra.mrb[0].mxu0 %v602
        %v737 = vpop.f32.mrb[0].mxu0
        %v738 = vadd.f32 %v629, %v737
        %v739 = vpop.f32.mrb[0].mxu0
        %v740 = vpop.f32.mrb[0].mxu0
        %v741 = vadd.f32 %v629, %v740
        %v742 = vpop.f32.mrb[0].mxu0
        %743 = vmatprep.mubr.bf16.mxu0 0
        %744 = vmatmul.mubr.bf16.gmra.mrb[0].mxu0 %v603
        %v745 = vpop.f32.mrb[0].mxu0
        %v746 = vadd.f32 %v629, %v745
        %v747 = vpop.f32.mrb[0].mxu0
        %v748 = vpop.f32.mrb[0].mxu0
        %v749 = vadd.f32 %v629, %v748
        %v750 = vpop.f32.mrb[0].mxu0
        %751 = vmatprep.mubr.bf16.mxu0 0
        %752 = vmatmul.mubr.bf16.gmra.mrb[0].mxu0 %v604
        %v753 = vpop.f32.mrb[0].mxu0
        %v754 = vadd.f32 %v629, %v753
        %v755 = vpop.f32.mrb[0].mxu0
        %v756 = vpop.f32.mrb[0].mxu0
        %v757 = vadd.f32 %v629, %v756
        %v758 = vpop.f32.mrb[0].mxu0
        %759 = vmatprep.mubr.bf16.mxu0 0
        %760 = vmatmul.mubr.bf16.gmra.mrb[0].mxu0 %v605
        %v761 = vpop.f32.mrb[0].mxu0
        %v762 = vadd.f32 %v629, %v761
        %v763 = vpop.f32.mrb[0].mxu0
        %v764 = vpop.f32.mrb[0].mxu0
        %v765 = vpop.f32.mrb[0].mxu0
        %766 = vdwg.mxu0
        %vm767 = vcmp.ge.f32.partialorder %v714, 0.0
        %vm768 = vcmp.ge.f32.partialorder %v717, 0.0
        %vm769 = vcmp.ge.f32.partialorder %v722, 0.0
        %vm770 = vcmp.ge.f32.partialorder %v725, 0.0
        %vm771 = vcmp.ge.f32.partialorder %v730, 0.0
        %vm772 = vcmp.ge.f32.partialorder %v733, 0.0
        %vm773 = vcmp.ge.f32.partialorder %v738, 0.0
        %vm774 = vcmp.ge.f32.partialorder %v741, 0.0
        %vm775 = vcmp.ge.f32.partialorder %v746, 0.0
        %vm776 = vcmp.ge.f32.partialorder %v749, 0.0
        %vm777 = vcmp.ge.f32.partialorder %v754, 0.0
        %vm778 = vcmp.ge.f32.partialorder %v757, 0.0
        %vm779 = vcmp.ge.f32.partialorder %v762, 0.0
        %v780 = vmul.f32 %v714, 0.01
        %v781 = vmul.f32 %v717, 0.01
        %v782 = vmul.f32 %v722, 0.01
        %v783 = vmul.f32 %v725, 0.01
        %v784 = vmul.f32 %v730, 0.01
        %v785 = vmul.f32 %v733, 0.01
        %v786 = vmul.f32 %v738, 0.01
        %v787 = vmul.f32 %v741, 0.01
        %v788 = vmul.f32 %v746, 0.01
        %v789 = vmul.f32 %v749, 0.01
        %v790 = vmul.f32 %v754, 0.01
        %v791 = vmul.f32 %v757, 0.01
        %v792 = vmul.f32 %v762, 0.01
        %v793 = vsel %vm767, %v714, %v780
        %v794 = vsel %vm768, %v717, %v781
        %v795 = vsel %vm769, %v722, %v782
        %v796 = vsel %vm770, %v725, %v783
        %v797 = vsel %vm771, %v730, %v784
        %v798 = vsel %vm772, %v733, %v785
        %v799 = vsel %vm773, %v738, %v786
        %v800 = vsel %vm774, %v741, %v787
        %v801 = vsel %vm775, %v746, %v788
        %v802 = vsel %vm776, %v749, %v789
        %v803 = vsel %vm777, %v754, %v790
        %v804 = vsel %vm778, %v757, %v791
        %v805 = vsel %vm779, %v762, %v792
        %v806 = vpack.c.bf16 %v794, %v793
        %v807 = vpack.c.bf16 %v796, %v795
        %v808 = vpack.c.bf16 %v798, %v797
        %v809 = vpack.c.bf16 %v800, %v799
        %v810 = vpack.c.bf16 %v802, %v801
        %v811 = vpack.c.bf16 %v804, %v803
        %v812 = vpack.c.bf16 %v805, %v805
        %s813 = scalar_lea.vmem [#allocation2], 192
        %v814 = vld [vmem:[%s813] sm:$0xf]
        %v815 = vld [vmem:[%s813 + $0x4] sm:$0xf]
        %v816 = vld [vmem:[%s813 + $0x8] sm:$0xf]
        %v817 = vld [vmem:[%s813 + $0xc] sm:$0xf]
        %v818 = vld [vmem:[%s813 + $0x10] sm:$0xf]
        %v819 = vld [vmem:[%s813 + $0x14] sm:$0xf]
        %v820 = vld [vmem:[%s813 + $0x18] sm:$0xf]
        %v821 = vld [vmem:[%s813 + $0x1c] sm:$0xf]
        %v822 = vld [vmem:[%s813 + $0x20] sm:$0xf]
        %v823 = vld [vmem:[%s813 + $0x24] sm:$0xf]
        %v824 = vld [vmem:[%s813 + $0x28] sm:$0xf]
        %v825 = vld [vmem:[%s813 + $0x2c] sm:$0xf]
        %v826 = vld [vmem:[%s813 + $0x30] sm:$0xf]
        %v827 = vld [vmem:[%s813 + $0x34] sm:$0xf]
        %v828 = vld [vmem:[%s813 + $0x38] sm:$0xf]
        %v829 = vld [vmem:[%s813 + $0x3c] sm:$0xf]
        %s830 = scalar_lea.vmem %s2, 3
        %v831 = vld [vmem:[%s830] sm:$0x1]
        %v833 = vlaneseq
        %v834 = vshrl.u32 %v833, 7
        %v835 = vsub.s32 0, %v834
        %v836 = vrot.slane %v831, %v835
        %v854 = vunpack.c.l.b16 %v814
        %v855 = vunpack.c.l.b16 %v815
        %v856 = vunpack.c.l.b16 %v816
        %v857 = vunpack.c.l.b16 %v817
        %v858 = vunpack.c.l.b16 %v818
        %v859 = vunpack.c.l.b16 %v819
        %v860 = vunpack.c.l.b16 %v820
        %v861 = vunpack.c.l.b16 %v821
        %v862 = vunpack.c.l.b16 %v822
        %v863 = vunpack.c.l.b16 %v823
        %v864 = vunpack.c.l.b16 %v824
        %v865 = vunpack.c.l.b16 %v825
        %v866 = vunpack.c.l.b16 %v826
        %v867 = vunpack.c.l.b16 %v827
        %v868 = vunpack.c.l.b16 %v828
        %v869 = vunpack.c.l.b16 %v829
        %v870 = vpack.c.b16 %v855, %v854
        %v871 = vpack.c.b16 %v857, %v856
        %v872 = vpack.c.b16 %v859, %v858
        %v873 = vpack.c.b16 %v861, %v860
        %v874 = vpack.c.b16 %v863, %v862
        %v875 = vpack.c.b16 %v865, %v864
        %v876 = vpack.c.b16 %v867, %v866
        %v877 = vpack.c.b16 %v869, %v868
        %886 = vmatprep.subr.bf16.mxu0 0
        %887 = vmatpush1.bf16.msra.mxu0 %v870
        %888 = vmatprep.subr.bf16.mxu0 0
        %889 = vmatpush1.bf16.msra.mxu0 %v871
        %890 = vmatprep.subr.bf16.mxu0 0
        %891 = vmatpush1.bf16.msra.mxu0 %v872
        %892 = vmatprep.subr.bf16.mxu0 0
        %893 = vmatpush1.bf16.msra.mxu0 %v873
        %894 = vmatprep.subr.bf16.mxu0 0
        %895 = vmatpush1.bf16.msra.mxu0 %v874
        %896 = vmatprep.subr.bf16.mxu0 0
        %897 = vmatpush1.bf16.msra.mxu0 %v875
        %898 = vmatprep.subr.bf16.mxu0 0
        %899 = vmatpush1.bf16.msra.mxu0 %v876
        %900 = vmatprep.subr.bf16.mxu0 0
        %901 = vmatpush1.bf16.msra.mxu0 %v877
        %902 = vmatprep.subr.bf16.mxu0 0
        %903 = vmatpush1.bf16.msra.mxu0 0
        %904 = vmatprep.subr.bf16.mxu0 0
        %905 = vmatpush1.bf16.msra.mxu0 0
        %906 = vmatprep.subr.bf16.mxu0 0
        %907 = vmatpush1.bf16.msra.mxu0 0
        %908 = vmatprep.subr.bf16.mxu0 0
        %909 = vmatpush1.bf16.msra.mxu0 0
        %910 = vmatprep.subr.bf16.mxu0 0
        %911 = vmatpush1.bf16.msra.mxu0 0
        %912 = vmatprep.subr.bf16.mxu0 0
        %913 = vmatpush1.bf16.msra.mxu0 0
        %914 = vmatprep.subr.bf16.mxu0 0
        %915 = vmatpush1.bf16.msra.mxu0 0
        %916 = vmatprep.subr.bf16.mxu0 0
        %917 = vmatpush1.bf16.msra.mxu0 0
        %918 = vmatprep.mubr.bf16.mxu0 0
        %919 = vmatmul.mubr.bf16.gmra.mrb[0].mxu0 %v806
        %v920 = vpop.f32.mrb[0].mxu0
        %v921 = vadd.f32 %v836, %v920
        %v922 = vpop.f32.mrb[0].mxu0
        %v923 = vpop.f32.mrb[0].mxu0
        %v924 = vadd.f32 %v836, %v923
        %v925 = vpop.f32.mrb[0].mxu0
        %926 = vmatprep.mubr.bf16.mxu0 0
        %927 = vmatmul.mubr.bf16.gmra.mrb[0].mxu0 %v807
        %v928 = vpop.f32.mrb[0].mxu0
        %v929 = vadd.f32 %v836, %v928
        %v930 = vpop.f32.mrb[0].mxu0
        %v931 = vpop.f32.mrb[0].mxu0
        %v932 = vadd.f32 %v836, %v931
        %v933 = vpop.f32.mrb[0].mxu0
        %934 = vmatprep.mubr.bf16.mxu0 0
        %935 = vmatmul.mubr.bf16.gmra.mrb[0].mxu0 %v808
        %v936 = vpop.f32.mrb[0].mxu0
        %v937 = vadd.f32 %v836, %v936
        %v938 = vpop.f32.mrb[0].mxu0
        %v939 = vpop.f32.mrb[0].mxu0
        %v940 = vadd.f32 %v836, %v939
        %v941 = vpop.f32.mrb[0].mxu0
        %942 = vmatprep.mubr.bf16.mxu0 0
        %943 = vmatmul.mubr.bf16.gmra.mrb[0].mxu0 %v809
        %v944 = vpop.f32.mrb[0].mxu0
        %v945 = vadd.f32 %v836, %v944
        %v946 = vpop.f32.mrb[0].mxu0
        %v947 = vpop.f32.mrb[0].mxu0
        %v948 = vadd.f32 %v836, %v947
        %v949 = vpop.f32.mrb[0].mxu0
        %950 = vmatprep.mubr.bf16.mxu0 0
        %951 = vmatmul.mubr.bf16.gmra.mrb[0].mxu0 %v810
        %v952 = vpop.f32.mrb[0].mxu0
        %v953 = vadd.f32 %v836, %v952
        %v954 = vpop.f32.mrb[0].mxu0
        %v955 = vpop.f32.mrb[0].mxu0
        %v956 = vadd.f32 %v836, %v955
        %v957 = vpop.f32.mrb[0].mxu0
        %958 = vmatprep.mubr.bf16.mxu0 0
        %959 = vmatmul.mubr.bf16.gmra.mrb[0].mxu0 %v811
        %v960 = vpop.f32.mrb[0].mxu0
        %v961 = vadd.f32 %v836, %v960
        %v962 = vpop.f32.mrb[0].mxu0
        %v963 = vpop.f32.mrb[0].mxu0
        %v964 = vadd.f32 %v836, %v963
        %v965 = vpop.f32.mrb[0].mxu0
        %966 = vmatprep.mubr.bf16.mxu0 0
        %967 = vmatmul.mubr.bf16.gmra.mrb[0].mxu0 %v812
        %v968 = vpop.f32.mrb[0].mxu0
        %v969 = vadd.f32 %v836, %v968
        %v970 = vpop.f32.mrb[0].mxu0
        %v971 = vpop.f32.mrb[0].mxu0
        %v972 = vpop.f32.mrb[0].mxu0
        %973 = vdwg.mxu0
        %vm974 = vcmp.ge.f32.partialorder %v921, 0.0
        %vm975 = vcmp.ge.f32.partialorder %v924, 0.0
        %vm976 = vcmp.ge.f32.partialorder %v929, 0.0
        %vm977 = vcmp.ge.f32.partialorder %v932, 0.0
        %vm978 = vcmp.ge.f32.partialorder %v937, 0.0
        %vm979 = vcmp.ge.f32.partialorder %v940, 0.0
        %vm980 = vcmp.ge.f32.partialorder %v945, 0.0
        %vm981 = vcmp.ge.f32.partialorder %v948, 0.0
        %vm982 = vcmp.ge.f32.partialorder %v953, 0.0
        %vm983 = vcmp.ge.f32.partialorder %v956, 0.0
        %vm984 = vcmp.ge.f32.partialorder %v961, 0.0
        %vm985 = vcmp.ge.f32.partialorder %v964, 0.0
        %vm986 = vcmp.ge.f32.partialorder %v969, 0.0
        %v987 = vmul.f32 %v921, 0.01
        %v988 = vmul.f32 %v924, 0.01
        %v989 = vmul.f32 %v929, 0.01
        %v990 = vmul.f32 %v932, 0.01
        %v991 = vmul.f32 %v937, 0.01
        %v992 = vmul.f32 %v940, 0.01
        %v993 = vmul.f32 %v945, 0.01
        %v994 = vmul.f32 %v948, 0.01
        %v995 = vmul.f32 %v953, 0.01
        %v996 = vmul.f32 %v956, 0.01
        %v997 = vmul.f32 %v961, 0.01
        %v998 = vmul.f32 %v964, 0.01
        %v999 = vmul.f32 %v969, 0.01
        %v1000 = vsel %vm974, %v921, %v987
        %v1001 = vsel %vm975, %v924, %v988
        %v1002 = vsel %vm976, %v929, %v989
        %v1003 = vsel %vm977, %v932, %v990
        %v1004 = vsel %vm978, %v937, %v991
        %v1005 = vsel %vm979, %v940, %v992
        %v1006 = vsel %vm980, %v945, %v993
        %v1007 = vsel %vm981, %v948, %v994
        %v1008 = vsel %vm982, %v953, %v995
        %v1009 = vsel %vm983, %v956, %v996
        %v1010 = vsel %vm984, %v961, %v997
        %v1011 = vsel %vm985, %v964, %v998
        %v1012 = vsel %vm986, %v969, %v999
        %vm1013 = vcmask 64512
        %1014 = vst.msk [vmem:[%s187] sm:$0xff] %vm1013, %v1000
        %1015 = vst.msk [vmem:[%s187 + $0x8] sm:$0xff] %vm1013, %v1001
        %1016 = vst.msk [vmem:[%s187 + $0x10] sm:$0xff] %vm1013, %v1002
        %1017 = vst.msk [vmem:[%s187 + $0x18] sm:$0xff] %vm1013, %v1003
        %1018 = vst.msk [vmem:[%s187 + $0x20] sm:$0xff] %vm1013, %v1004
        %1019 = vst.msk [vmem:[%s187 + $0x28] sm:$0xff] %vm1013, %v1005
        %1020 = vst.msk [vmem:[%s187 + $0x30] sm:$0xff] %vm1013, %v1006
        %1021 = vst.msk [vmem:[%s187 + $0x38] sm:$0xff] %vm1013, %v1007
        %1022 = vst.msk [vmem:[%s187 + $0x40] sm:$0xff] %vm1013, %v1008
        %1023 = vst.msk [vmem:[%s187 + $0x48] sm:$0xff] %vm1013, %v1009
        %1024 = vst.msk [vmem:[%s187 + $0x50] sm:$0xff] %vm1013, %v1010
        %1025 = vst.msk [vmem:[%s187 + $0x58] sm:$0xff] %vm1013, %v1011
        %1026 = vst.msk [vmem:[%s187 + $0x60] sm:$0xff] %vm1013, %v1012
        %s1027 = sand.u32 %s91, 1
        %s1028 = sand.u32 %s91, 1
        %s1029 = smul.addr %s1028, 104
        %s1030 = scalar_lea.vmem [#allocation4], %s1029
        // Predicated region
        $region37: #{mlp_forward.1} parent=31 // pred_check
          %p1031 = pneg %p101
        $region38: #{mlp_forward.1} parent=31 // pred_check_branch
          %1033 = sbr.rel (%p1031) target = $region40
        $region39: #{mlp_forward.1} parent=31 // pred_region
          %s1034 = smul.u32 13, %s15
          %s1035 = ssub.s32 25, %s1034
          %p1036 = scmp.lt.s32.totalorder %s1035, 13
          %s1037 = scalar_select %p1036, %s1035, 13
          %s1038 = smul.u32 128, %s1037
          %p1039 = scmp.ne.s32.totalorder 0, %s1038
          %s1040 = smul.addr %s1034, 8
          %s1041 = scalar_lea.vmem %s3, %s1040
          // Predicated region
          $region41: #{mlp_forward.1} parent=39 // pred_check
            %p1042 = pneg %p1039
          $region42: #{mlp_forward.1} parent=39 // pred_check_branch
            %1044 = sbr.rel (%p1042) target = $region44
          $region43: #{mlp_forward.1} parent=39 // pred_region
            // Predicated region
            $region45: #{mlp_forward.1} parent=43 // pred_check
              _
            $region46: #{mlp_forward.1} parent=43 // pred_check_branch
              %1046 = sbr.rel (0) target = $region48
            $region47: #{mlp_forward.1} parent=43 // pred_region
              // Predicated region
              $region67: #{mlp_forward.1} parent=47 // pred_check
                _
              $region68: #{mlp_forward.1} parent=47 // pred_check_branch
                %1120 = sbr.rel (0) target = $region70
              $region69: #{mlp_forward.1} parent=47 // pred_region
                %s1121 = sdiv.u32.pop %s1037, 13
                %s1122 = srem.u32.pop %s1037, 13
                // While loop
                $region71: #{mlp_forward.1} parent=69 // loop_pre_header
                  _
                $region72: #{mlp_forward.1} parent=69 // loop_header
                  %s1124 = sphi 0, %s1126
                  %p1125 = scmp.ge.s32.totalorder %s1124, %s1121
                  %s1129 = sphi 0, %s1160
                  %s1130 = sphi %s1030, %s1163
                  %s1131 = sphi %s1041, %s1164
                $region73: #{mlp_forward.1} parent=69 // loop_header_branch
                  %1128 = sbr.rel (%p1125) target = $region77
                $region74: #{mlp_forward.1} parent=69 // loop_body
                  %v1132 = vld [vmem:[%s1130] sm:$0xff]
                  %1133 = vst [vmem:[%s1131] sm:$0xff] %v1132
                  %v1134 = vld [vmem:[%s1130 + $0x8] sm:$0xff]
                  %1135 = vst [vmem:[%s1131 + $0x8] sm:$0xff] %v1134
                  %v1136 = vld [vmem:[%s1130 + $0x10] sm:$0xff]
                  %1137 = vst [vmem:[%s1131 + $0x10] sm:$0xff] %v1136
                  %v1138 = vld [vmem:[%s1130 + $0x18] sm:$0xff]
                  %1139 = vst [vmem:[%s1131 + $0x18] sm:$0xff] %v1138
                  %v1140 = vld [vmem:[%s1130 + $0x20] sm:$0xff]
                  %1141 = vst [vmem:[%s1131 + $0x20] sm:$0xff] %v1140
                  %v1142 = vld [vmem:[%s1130 + $0x28] sm:$0xff]
                  %1143 = vst [vmem:[%s1131 + $0x28] sm:$0xff] %v1142
                  %v1144 = vld [vmem:[%s1130 + $0x30] sm:$0xff]
                  %1145 = vst [vmem:[%s1131 + $0x30] sm:$0xff] %v1144
                  %v1146 = vld [vmem:[%s1130 + $0x38] sm:$0xff]
                  %1147 = vst [vmem:[%s1131 + $0x38] sm:$0xff] %v1146
                  %v1148 = vld [vmem:[%s1130 + $0x40] sm:$0xff]
                  %1149 = vst [vmem:[%s1131 + $0x40] sm:$0xff] %v1148
                  %v1150 = vld [vmem:[%s1130 + $0x48] sm:$0xff]
                  %1151 = vst [vmem:[%s1131 + $0x48] sm:$0xff] %v1150
                  %v1152 = vld [vmem:[%s1130 + $0x50] sm:$0xff]
                  %1153 = vst [vmem:[%s1131 + $0x50] sm:$0xff] %v1152
                  %v1154 = vld [vmem:[%s1130 + $0x58] sm:$0xff]
                  %1155 = vst [vmem:[%s1131 + $0x58] sm:$0xff] %v1154
                  %v1156 = vld [vmem:[%s1130 + $0x60] sm:$0xff]
                  %1157 = vst [vmem:[%s1131 + $0x60] sm:$0xff] %v1156
                  %s1158 = sadd.s32 1, %s1129
                  %p1159 = scmp.ge.s32.totalorder %s1158, %s1121
                  %s1160 = scalar_select %p1159, 0, %s1158
                  %s1161 = smul.u32 %s1160, 104
                  %s1162 = smul.u32 %s1160, 104
                  %s1163 = scalar_lea.vmem %s1030, %s1161 [#allocation4]
                  %s1164 = scalar_lea.vmem %s1041, %s1162
                $region75: #{mlp_forward.1} parent=69 // loop_footer
                  %s1126 = sadd.s32 %s1124, 1
                $region76: #{mlp_forward.1} parent=69 // loop_footer_branch
                  %1123 = sbr.rel target = $region72
                $region77: #{mlp_forward.1} parent=69 // loop_exit
                  _
                %s1165 = sdiv.u32.pop %s1037, 13
                %s1166 = srem.u32.pop %s1037, 13
                %s1167 = smul.u32 %s1165, 13
                %s1168 = smul.u32 8, %s1167
                %s1169 = scalar_lea.vmem %s1030, %s1168 [#allocation4]
                %s1170 = smul.u32 8, %s1167
                %s1171 = scalar_lea.vmem %s1041, %s1170
                // While loop
                $region78: #{mlp_forward.1} parent=69 // loop_pre_header
                  _
                $region79: #{mlp_forward.1} parent=69 // loop_header
                  %s1173 = sphi 0, %s1175
                  %p1174 = scmp.ge.s32.totalorder %s1173, %s1166
                  %s1178 = sphi 0, %s1185
                  %s1179 = sphi %s1169, %s1188
                  %s1180 = sphi %s1171, %s1189
                $region80: #{mlp_forward.1} parent=69 // loop_header_branch
                  %1177 = sbr.rel (%p1174) target = $region84
                $region81: #{mlp_forward.1} parent=69 // loop_body
                  %v1181 = vld [vmem:[%s1179] sm:$0xff]
                  %1182 = vst [vmem:[%s1180] sm:$0xff] %v1181
                  %s1183 = sadd.s32 1, %s1178
                  %p1184 = scmp.ge.s32.totalorder %s1183, %s1166
                  %s1185 = scalar_select %p1184, 0, %s1183
                  %s1186 = smul.u32 %s1185, 8
                  %s1187 = smul.u32 %s1185, 8
                  %s1188 = scalar_lea.vmem %s1169, %s1186 [#allocation4]
                  %s1189 = scalar_lea.vmem %s1171, %s1187
                $region82: #{mlp_forward.1} parent=69 // loop_footer
                  %s1175 = sadd.s32 %s1173, 1
                $region83: #{mlp_forward.1} parent=69 // loop_footer_branch
                  %1172 = sbr.rel target = $region79
                $region84: #{mlp_forward.1} parent=69 // loop_exit
                  _
              $region70: #{mlp_forward.1} parent=47 // pred_fallthru
                _
              // Predicated region
              $region85: #{mlp_forward.1} parent=47 // pred_check
                _
              $region86: #{mlp_forward.1} parent=47 // pred_check_branch
                %1191 = sbr.rel target = $region88
              $region87: #{mlp_forward.1} parent=47 // pred_region
                _
              $region88: #{mlp_forward.1} parent=47 // pred_fallthru
                _
            $region48: #{mlp_forward.1} parent=43 // pred_fallthru
              _
            // Predicated region
            $region49: #{mlp_forward.1} parent=43 // pred_check
              _
            $region50: #{mlp_forward.1} parent=43 // pred_check_branch
              %1048 = sbr.rel target = $region52
            $region51: #{mlp_forward.1} parent=43 // pred_region
              %s1050 = sdiv.u32.pop %s1037, 13
              %s1051 = srem.u32.pop %s1037, 13
              // While loop
              $region53: #{mlp_forward.1} parent=51 // loop_pre_header
                _
              $region54: #{mlp_forward.1} parent=51 // loop_header
                %s1053 = sphi 0, %s1055
                %p1054 = scmp.ge.s32.totalorder %s1053, %s1050
                %s1058 = sphi 0, %s1089
                %s1059 = sphi %s1030, %s1092
                %s1060 = sphi %s1041, %s1093
              $region55: #{mlp_forward.1} parent=51 // loop_header_branch
                %1057 = sbr.rel (%p1054) target = $region59
              $region56: #{mlp_forward.1} parent=51 // loop_body
                %v1061 = vld [vmem:[%s1059] sm:$0xff]
                %1062 = vst [vmem:[%s1060] sm:$0xff] %v1061
                %v1063 = vld [vmem:[%s1059 + $0x8] sm:$0xff]
                %1064 = vst [vmem:[%s1060 + $0x8] sm:$0xff] %v1063
                %v1065 = vld [vmem:[%s1059 + $0x10] sm:$0xff]
                %1066 = vst [vmem:[%s1060 + $0x10] sm:$0xff] %v1065
                %v1067 = vld [vmem:[%s1059 + $0x18] sm:$0xff]
                %1068 = vst [vmem:[%s1060 + $0x18] sm:$0xff] %v1067
                %v1069 = vld [vmem:[%s1059 + $0x20] sm:$0xff]
                %1070 = vst [vmem:[%s1060 + $0x20] sm:$0xff] %v1069
                %v1071 = vld [vmem:[%s1059 + $0x28] sm:$0xff]
                %1072 = vst [vmem:[%s1060 + $0x28] sm:$0xff] %v1071
                %v1073 = vld [vmem:[%s1059 + $0x30] sm:$0xff]
                %1074 = vst [vmem:[%s1060 + $0x30] sm:$0xff] %v1073
                %v1075 = vld [vmem:[%s1059 + $0x38] sm:$0xff]
                %1076 = vst [vmem:[%s1060 + $0x38] sm:$0xff] %v1075
                %v1077 = vld [vmem:[%s1059 + $0x40] sm:$0xff]
                %1078 = vst [vmem:[%s1060 + $0x40] sm:$0xff] %v1077
                %v1079 = vld [vmem:[%s1059 + $0x48] sm:$0xff]
                %1080 = vst [vmem:[%s1060 + $0x48] sm:$0xff] %v1079
                %v1081 = vld [vmem:[%s1059 + $0x50] sm:$0xff]
                %1082 = vst [vmem:[%s1060 + $0x50] sm:$0xff] %v1081
                %v1083 = vld [vmem:[%s1059 + $0x58] sm:$0xff]
                %1084 = vst [vmem:[%s1060 + $0x58] sm:$0xff] %v1083
                %v1085 = vld [vmem:[%s1059 + $0x60] sm:$0xff]
                %1086 = vst [vmem:[%s1060 + $0x60] sm:$0xff] %v1085
                %s1087 = sadd.s32 1, %s1058
                %p1088 = scmp.ge.s32.totalorder %s1087, %s1050
                %s1089 = scalar_select %p1088, 0, %s1087
                %s1090 = smul.u32 %s1089, 104
                %s1091 = smul.u32 %s1089, 104
                %s1092 = scalar_lea.vmem %s1030, %s1090 [#allocation4]
                %s1093 = scalar_lea.vmem %s1041, %s1091
              $region57: #{mlp_forward.1} parent=51 // loop_footer
                %s1055 = sadd.s32 %s1053, 1
              $region58: #{mlp_forward.1} parent=51 // loop_footer_branch
                %1052 = sbr.rel target = $region54
              $region59: #{mlp_forward.1} parent=51 // loop_exit
                _
              %s1094 = sdiv.u32.pop %s1037, 13
              %s1095 = srem.u32.pop %s1037, 13
              %s1096 = smul.u32 %s1094, 13
              %s1097 = smul.u32 8, %s1096
              %s1098 = scalar_lea.vmem %s1030, %s1097 [#allocation4]
              %s1099 = smul.u32 8, %s1096
              %s1100 = scalar_lea.vmem %s1041, %s1099
              // While loop
              $region60: #{mlp_forward.1} parent=51 // loop_pre_header
                _
              $region61: #{mlp_forward.1} parent=51 // loop_header
                %s1102 = sphi 0, %s1104
                %p1103 = scmp.ge.s32.totalorder %s1102, %s1095
                %s1107 = sphi 0, %s1114
                %s1108 = sphi %s1098, %s1117
                %s1109 = sphi %s1100, %s1118
              $region62: #{mlp_forward.1} parent=51 // loop_header_branch
                %1106 = sbr.rel (%p1103) target = $region66
              $region63: #{mlp_forward.1} parent=51 // loop_body
                %v1110 = vld [vmem:[%s1108] sm:$0xff]
                %1111 = vst [vmem:[%s1109] sm:$0xff] %v1110
                %s1112 = sadd.s32 1, %s1107
                %p1113 = scmp.ge.s32.totalorder %s1112, %s1095
                %s1114 = scalar_select %p1113, 0, %s1112
                %s1115 = smul.u32 %s1114, 8
                %s1116 = smul.u32 %s1114, 8
                %s1117 = scalar_lea.vmem %s1098, %s1115 [#allocation4]
                %s1118 = scalar_lea.vmem %s1100, %s1116
              $region64: #{mlp_forward.1} parent=51 // loop_footer
                %s1104 = sadd.s32 %s1102, 1
              $region65: #{mlp_forward.1} parent=51 // loop_footer_branch
                %1101 = sbr.rel target = $region61
              $region66: #{mlp_forward.1} parent=51 // loop_exit
                _
            $region52: #{mlp_forward.1} parent=43 // pred_fallthru
              _
          $region44: #{mlp_forward.1} parent=39 // pred_fallthru
            _
          %1192 = vnop
        $region40: #{mlp_forward.1} parent=31 // pred_fallthru
          _
      $region32: #{mlp_forward.1} parent=5 // pred_fallthru
        _
      %p1193 = scmp.le.s32.totalorder 2, %s10
      // Predicated region
      $region89: #{mlp_forward.1} parent=5 // pred_check
        %p1194 = pneg %p1193
      $region90: #{mlp_forward.1} parent=5 // pred_check_branch
        %1196 = sbr.rel (%p1194) target = $region92
      $region91: #{mlp_forward.1} parent=5 // pred_region
        %s1197 = ssub.s32 %s10, 2
        // Predicated region
        $region93: #{mlp_forward.1} parent=91 // pred_check
          %p1198 = pneg %p107
        $region94: #{mlp_forward.1} parent=91 // pred_check_branch
          %1200 = sbr.rel (%p1198) target = $region96
        $region95: #{mlp_forward.1} parent=91 // pred_region
          %s1201 = sand.u32 %s92, 1
          %s1202 = sand.u32 %s92, 1
          %s1203 = smul.addr %s1202, 104
          %s1204 = scalar_lea.vmem [#allocation4], %s1203
        $region96: #{mlp_forward.1} parent=91 // pred_fallthru
          _
      $region92: #{mlp_forward.1} parent=5 // pred_fallthru
        _
    $region6: #{mlp_forward.1} parent=1 // loop_footer
      %s14 = sadd.s32 1, %s10
    $region7: #{mlp_forward.1} parent=1 // loop_footer_branch
      %9 = sbr.rel target = $region3
    $region8: #{mlp_forward.1} parent=1 // loop_exit
      _
    %1205 = vsyncpa [#allocation3], 1
    %s1206 = scalar_lea.sflag [#allocation3], 1
    %1207 = vsyncpa %s1206, 1

</llo_original>
